<compile_context>
chip_gen: v7x
topology: tpu7x:2x2x1
jax: 0.10.0
libtpu: 0.0.40
codegen_flags: <defaults>
</compile_context>

<pallas_src>
import functools

import jax
import jax.numpy as jnp
from jax import lax
from jax.experimental import pallas as pl
from jax.experimental.pallas import tpu as pltpu

_LANES = 128


def _entropy_loss_kernel(
    p_ref, q_ref, acc_ref, *,
    tile_rows, acc_rows, inner_steps, total_blocks,
    valid_rows_last, needs_tail_mask, has_clamped,
):
    c = pl.program_id(0)   # parallel split (TensorCore shard on multi-TC chips)
    i = pl.program_id(1)   # sequential reduction steps within this split

    @pl.when(i == 0)
    def _init():
        acc_ref[...] = jnp.zeros_like(acc_ref)

    block_idx = c * inner_steps + i

    def fold(x):
        # Fold the (tile_rows, 128) product into the resident accumulator block.
        # With acc_rows wide (64 when possible) the adds form several independent
        # chains per step, hiding VPU add latency.
        if acc_rows == tile_rows:
            acc_ref[...] += x
        else:
            acc_ref[...] += x.reshape(
                tile_rows // acc_rows, acc_rows, _LANES).sum(axis=0)

    def accumulate():
        # Hot path: EUP log + VPU mul + VPU adds.  No per-element masking here.
        prod = q_ref[...].astype(jnp.float32) * jnp.log(
            p_ref[...].astype(jnp.float32))
        if needs_tail_mask:
            is_tail = block_idx == total_blocks - 1

            @pl.when(block_idx != total_blocks - 1)
            def _interior():
                fold(prod)

            @pl.when(is_tail)
            def _tail():
                # Only the (pipeline-padded) partial last block pays for the
                # iota + select; rows >= valid_rows_last hold stale VMEM data.
                row_ids = lax.broadcasted_iota(
                    jnp.int32, (tile_rows, _LANES), 0)
                fold(jnp.where(row_ids < valid_rows_last, prod, 0.0))
        else:
            fold(prod)

    if has_clamped:
        # Out-of-range steps of the last split re-read a clamped (valid) block;
        # skip their contribution with a scalar-side predicate (zero VPU cost).
        pl.when(block_idx < total_blocks)(accumulate)
    else:
        accumulate()


def _default_num_splits():
    # v7x has 2 TensorCores per chip; single-TC chips (v5e/v6e) get 1 split so
    # there is no clamped duplicate step and no min() in the index map.
    try:
        info = pltpu.get_tpu_info()
        for attr in ("tensorcores_per_chip", "num_tensorcores",
                     "core_count", "num_cores"):
            v = getattr(info, attr, None)
            if v:
                return max(1, min(int(v), 8))
    except Exception:
        pass
    return 2


def entropy_loss(p, q, *, tile_rows=8192, num_splits=None):
    """Computes -(q * log(p)).sum() with a Pallas TPU kernel."""
    assert p.shape == q.shape, "p and q must have identical shapes"
    n = p.size
    if n == 0:
        return jnp.zeros((), jnp.float32)

    p_flat = p.reshape(-1)
    q_flat = q.reshape(-1)

    if n % _LANES != 0:
        # Pad with benign values (p=1, q=0) so q*log(p) == 0 in the pad region:
        # no in-kernel mask is needed for it and no NaN can leak.
        # TODO(synk): a 1-D BlockSpec path would avoid this full pad copy for
        # very large unaligned inputs (verify lowering with pl.lower_as_mlir).
        pad = (-n) % (8 * _LANES)
        p_flat = jnp.pad(p_flat, (0, pad), constant_values=1.0)
        q_flat = jnp.pad(q_flat, (0, pad), constant_values=0.0)

    rows = p_flat.size // _LANES
    p2 = p_flat.reshape(rows, _LANES)   # free reshape: lane-dense slab
    q2 = q_flat.reshape(rows, _LANES)

    # Block sizing.  If the whole slab fits in one tile, use it (block == full
    # dims is always legal); otherwise keep tile_rows a multiple of 8.
    tile_rows = int(tile_rows)
    if rows <= tile_rows:
        tile_rows = rows
    else:
        tile_rows = max(8, (tile_rows // 8) * 8)

    total_blocks = pl.cdiv(rows, tile_rows)
    if num_splits is None:
        num_splits = _default_num_splits()
    num_splits = max(1, min(int(num_splits), total_blocks))
    inner_steps = pl.cdiv(total_blocks, num_splits)
    has_clamped = num_splits * inner_steps > total_blocks

    valid_rows_last = rows - (total_blocks - 1) * tile_rows
    needs_tail_mask = valid_rows_last != tile_rows

    # Widest accumulator block (<= tile) dividing tile_rows: breaks the serial
    # add chain and improves summation accuracy.
    acc_rows = next((a for a in (64, 32, 16, 8) if tile_rows % a == 0),
                    tile_rows)

    kernel = functools.partial(
        _entropy_loss_kernel,
        tile_rows=tile_rows,
        acc_rows=acc_rows,
        inner_steps=inner_steps,
        total_blocks=total_blocks,
        valid_rows_last=valid_rows_last,
        needs_tail_mask=needs_tail_mask,
        has_clamped=has_clamped,
    )

    if has_clamped:
        def in_map(c, i):
            # Clamp so out-of-range steps of the last split re-read a valid
            # block; their contribution is skipped inside the kernel.
            return (jnp.minimum(c * inner_steps + i, total_blocks - 1), 0)
    else:
        def in_map(c, i):
            return (c * inner_steps + i, 0)

    partial_sums = pl.pallas_call(
        kernel,
        out_shape=jax.ShapeDtypeStruct((num_splits, acc_rows, _LANES),
                                       jnp.float32),
        grid_spec=pltpu.PrefetchScalarGridSpec(
            num_scalar_prefetch=0,
            grid=(num_splits, inner_steps),
            in_specs=[
                pl.BlockSpec((tile_rows, _LANES), in_map),
                pl.BlockSpec((tile_rows, _LANES), in_map),
            ],
            out_specs=pl.BlockSpec((None, acc_rows, _LANES),
                                   lambda c, i: (c, 0, 0)),
        ),
        compiler_params=pltpu.CompilerParams(
            dimension_semantics=("parallel", "arbitrary"),
            # 2 inputs x 2 pipeline buffers x 4 MiB (f32, tile_rows=8192) plus
            # headroom; stays under v7x's 64 MiB physical VMEM.
            vmem_limit_bytes=48 * 1024 * 1024,
        ),
    )(p2, q2)

    # Tiny epilogue: one cross-lane reduction of the partial-sum slab + negate.
    return -jnp.sum(partial_sums)


if __name__ == "__main__":
    key = jax.random.PRNGKey(0)
    kp, kq = jax.random.split(key)

    # 1) Small NCHW-like tensors consistent with the module's usage; size is a
    #    multiple of 1024 -> no pad, single block, mask-free path.
    shape = (2, 4, 16, 16)
    p = jax.nn.softmax(jax.random.normal(kp, shape), axis=-1)
    q = jax.nn.softmax(jax.random.normal(kq, shape), axis=-1)
    loss = jax.block_until_ready(entropy_loss(p, q))
    ref = -jnp.sum(q * jnp.log(p))
    assert jnp.allclose(loss, ref, rtol=1e-5, atol=1e-5), (loss, ref)

    # 2) Size not a multiple of 128 exercises the benign-value pad path.
    shape2 = (3, 5, 7, 11)
    kp2, kq2 = jax.random.split(jax.random.PRNGKey(0))
    p2 = jax.nn.softmax(jax.random.normal(kp2, shape2), axis=-1) + 1e-3
    q2 = jax.nn.softmax(jax.random.normal(kq2, shape2), axis=-1)
    loss2 = jax.block_until_ready(entropy_loss(p2, q2))
    ref2 = -jnp.sum(q2 * jnp.log(p2))
    assert jnp.allclose(loss2, ref2, rtol=1e-5, atol=1e-5), (loss2, ref2)

    # 3) Multi-block grid with a partial last block AND a clamped duplicate step
    #    (small tile forced for test coverage): exercises the tail-row mask and
    #    the scalar-side skip of clamped steps.
    shape3 = (2, 4, 42, 64)   # 21504 elements -> 168 rows of 128 lanes
    kp3, kq3 = jax.random.split(jax.random.PRNGKey(1))
    p3 = jax.nn.softmax(jax.random.normal(kp3, shape3), axis=-1)
    q3 = jax.nn.softmax(jax.random.normal(kq3, shape3), axis=-1)
    loss3 = jax.block_until_ready(entropy_loss(p3, q3, tile_rows=48,
                                               num_splits=3))
    ref3 = -jnp.sum(q3 * jnp.log(p3))
    assert jnp.allclose(loss3, ref3, rtol=1e-4, atol=1e-4), (loss3, ref3)

    print("KERNEL_OK")
</pallas_src>

<mosaic_0001>
module attributes {stable_mosaic.version = 11 : i64} {
  func.func @_entropy_loss_kernel(%arg0: i32, %arg1: i32, %arg2: memref<16x128xf32, #tpu.memory_space<vmem>>, %arg3: memref<16x128xf32, #tpu.memory_space<vmem>>, %arg4: memref<1x16x128xf32, #tpu.memory_space<vmem>>) attributes {dimension_semantics = [#tpu.dimension_semantics<parallel>, #tpu.dimension_semantics<arbitrary>], iteration_bounds = array<i64: 1, 1>, scalar_prefetch = 0 : i64, scratch_operands = 0 : i64, tpu.core_type = #tpu.core_type<tc>, window_params = [{transform_indices = @transform_0, window_bounds = array<i64: 16, 128>}, {transform_indices = @transform_1, window_bounds = array<i64: 16, 128>}, {transform_indices = @transform_2, window_bounds = array<i64: 1, 16, 128>}]} {
    %c0_i32 = arith.constant 0 : i32
    %0 = arith.cmpi eq, %arg1, %c0_i32 : i32
    %1 = arith.extui %0 : i1 to i32
    %c0_i32_0 = arith.constant 0 : i32
    %2 = arith.cmpi ne, %1, %c0_i32_0 : i32
    scf.if %2 {
      %cst = arith.constant 0.000000e+00 : f32
      %13 = vector.broadcast %cst : f32 to vector<16x128xf32>
      %c0_10 = arith.constant 0 : index
      %c0_11 = arith.constant 0 : index
      %c0_12 = arith.constant 0 : index
      %14 = vector.load %arg4[%c0_10, %c0_11, %c0_12] : memref<1x16x128xf32, #tpu.memory_space<vmem>>, vector<1x16x128xf32>
      %15 = vector.shape_cast %14 : vector<1x16x128xf32> to vector<16x128xf32>
      %16 = vector.shape_cast %13 : vector<16x128xf32> to vector<1x16x128xf32>
      tpu.vector_store %arg4[%c0_10, %c0_11, %c0_12], %16 {strides = array<i32>} : memref<1x16x128xf32, #tpu.memory_space<vmem>>, vector<1x16x128xf32>,
    } else {
    }
    %c0 = arith.constant 0 : index
    %c0_1 = arith.constant 0 : index
    %3 = vector.load %arg3[%c0, %c0_1] : memref<16x128xf32, #tpu.memory_space<vmem>>, vector<16x128xf32>
    %c0_2 = arith.constant 0 : index
    %c0_3 = arith.constant 0 : index
    %4 = vector.load %arg2[%c0_2, %c0_3] : memref<16x128xf32, #tpu.memory_space<vmem>>, vector<16x128xf32>
    %5 = math.log %4 : vector<16x128xf32>
    %6 = arith.mulf %3, %5 : vector<16x128xf32>
    %c0_4 = arith.constant 0 : index
    %c0_5 = arith.constant 0 : index
    %c0_6 = arith.constant 0 : index
    %7 = vector.load %arg4[%c0_4, %c0_5, %c0_6] : memref<1x16x128xf32, #tpu.memory_space<vmem>>, vector<1x16x128xf32>
    %8 = vector.shape_cast %7 : vector<1x16x128xf32> to vector<16x128xf32>
    %9 = arith.addf %8, %6 : vector<16x128xf32>
    %c0_7 = arith.constant 0 : index
    %c0_8 = arith.constant 0 : index
    %c0_9 = arith.constant 0 : index
    %10 = vector.load %arg4[%c0_7, %c0_8, %c0_9] : memref<1x16x128xf32, #tpu.memory_space<vmem>>, vector<1x16x128xf32>
    %11 = vector.shape_cast %10 : vector<1x16x128xf32> to vector<16x128xf32>
    %12 = vector.shape_cast %9 : vector<16x128xf32> to vector<1x16x128xf32>
    tpu.vector_store %arg4[%c0_7, %c0_8, %c0_9], %12 {strides = array<i32>} : memref<1x16x128xf32, #tpu.memory_space<vmem>>, vector<1x16x128xf32>,
    return
  }
  func.func @transform_0(%arg0: i32, %arg1: i32) -> (i32, i32) {
    %c1_i32 = arith.constant 1 : i32
    %0 = arith.muli %arg0, %c1_i32 : i32
    %1 = arith.addi %0, %arg1 : i32
    %c0_i32 = arith.constant 0 : i32
    %c0_i32_0 = arith.constant 0 : i32
    return %1, %c0_i32 : i32, i32
  }
  func.func @transform_1(%arg0: i32, %arg1: i32) -> (i32, i32) {
    %c1_i32 = arith.constant 1 : i32
    %0 = arith.muli %arg0, %c1_i32 : i32
    %1 = arith.addi %0, %arg1 : i32
    %c0_i32 = arith.constant 0 : i32
    %c0_i32_0 = arith.constant 0 : i32
    return %1, %c0_i32 : i32, i32
  }
  func.func @transform_2(%arg0: i32, %arg1: i32) -> (i32, i32, i32) {
    %c0_i32 = arith.constant 0 : i32
    %c0_i32_0 = arith.constant 0 : i32
    %c0_i32_1 = arith.constant 0 : i32
    return %arg0, %c0_i32, %c0_i32_0 : i32, i32, i32
  }
}

</mosaic_0001>

<llo_original>
// kernel: tpu_custom_call.1
$region0: #{tpu_custom_call.1}
  #allocation0 [shape = 'u32[]', space=smem, size = 0x4, offset = 0x4, fixed_abs, tag = 'smem constant byte address 0x4 - core index']
  #allocation1 [shape = 'u32[144,128]{1,0:T(1,128)}', space=vmem, size = 0x12000, scoped, tag = 'internal scratch']
  %s0 = inlined_call_operand.hbm [shape: f32[16,128], index: 0, kind: input, shape index: {}]
  %s1 = inlined_call_operand.hbm [shape: f32[16,128], index: 1, kind: input, shape index: {}]
  %s2 = inlined_call_operand.hbm [shape: f32[1,16,128], index: 2, kind: output, shape index: {}]
  %s3 = sld [smem:[#allocation0]]
  $region30: #{tpu_custom_call.1} parent=0
    _
  %s5 = ssub.s32 1, %s3
  %s6 = scalar_select 0, %s5, %s3
  $region1: #{tpu_custom_call.1} parent=0
    #allocation2 [shape = 'u8[8192]{0}', space=vmem, size = 0x2000, scoped, tag = 'input window, operand 0, single buffered']
    #allocation3 [shape = 's32[1]{0}', space=sflag, size = 0x4, scoped, tag = 'scoped memory for tpu_custom_call.1']
    #allocation4 [shape = 's32[1]{0}', space=sflag, size = 0x4, scoped, tag = 'scoped memory for tpu_custom_call.1']
    #allocation5 [shape = 'u8[8192]{0}', space=vmem, size = 0x2000, scoped, tag = 'input window, operand 1, single buffered']
    #allocation6 [shape = 's32[1]{0}', space=sflag, size = 0x4, scoped, tag = 'scoped memory for tpu_custom_call.1']
    #allocation7 [shape = 'u8[8192]{0}', space=vmem, size = 0x2000, scoped, tag = 'output window, operand 0, single buffered']
    %7 = vsyncpa [#allocation3], 0
    %8 = vsyncpa [#allocation6], 0
    %9 = vsyncpa [#allocation4], 0
    // Predicated region
    $region2: #{tpu_custom_call.1} parent=1 // pred_check
      _
    $region3: #{tpu_custom_call.1} parent=1 // pred_check_branch
      %11 = sbr.rel (0) target = $region5
    $region4: #{tpu_custom_call.1} parent=1 // pred_region
      %s12 = sadd.s32 0, 0
      %s13 = smul.u32 2, %s12
      %s15 = ssub.s32 256, 256
      %16 = vsyncadd [#allocation3], %s15
      %s17 = smul.addr %s13, 128
      %s18 = scalar_lea.hbm %s0, %s17
      %s19 = sshll.u32 [#allocation2], 4
      %s20 = int_to_ptr.vmem [resolvable:$true] %s19
      %25 = dma.hbm_to_vmem [thread:$0]  %s18, 256, %s20, [#allocation3], 128, 128, 8
    $region5: #{tpu_custom_call.1} parent=1 // pred_fallthru
      _
    // Predicated region
    $region6: #{tpu_custom_call.1} parent=1 // pred_check
      _
    $region7: #{tpu_custom_call.1} parent=1 // pred_check_branch
      %27 = sbr.rel (0) target = $region9
    $region8: #{tpu_custom_call.1} parent=1 // pred_region
      %s28 = sadd.s32 0, 0
      %s29 = smul.u32 2, %s28
      %s31 = ssub.s32 256, 256
      %32 = vsyncadd [#allocation6], %s31
      %s33 = smul.addr %s29, 128
      %s34 = scalar_lea.hbm %s1, %s33
      %s35 = sshll.u32 [#allocation5], 4
      %s36 = int_to_ptr.vmem [resolvable:$true] %s35
      %41 = dma.hbm_to_vmem [thread:$0]  %s34, 256, %s36, [#allocation6], 128, 128, 8
    $region9: #{tpu_custom_call.1} parent=1 // pred_fallthru
      _
    // Predicated region
    $region10: #{tpu_custom_call.1} parent=1 // pred_check
      _
    $region11: #{tpu_custom_call.1} parent=1 // pred_check_branch
      %43 = sbr.rel (0) target = $region13
    $region12: #{tpu_custom_call.1} parent=1 // pred_region
      %44 = dma.done [#allocation3], 256
    $region13: #{tpu_custom_call.1} parent=1 // pred_fallthru
      _
    // Predicated region
    $region14: #{tpu_custom_call.1} parent=1 // pred_check
      _
    $region15: #{tpu_custom_call.1} parent=1 // pred_check_branch
      %46 = sbr.rel (0) target = $region17
    $region16: #{tpu_custom_call.1} parent=1 // pred_region
      %47 = dma.done [#allocation6], 256
    $region17: #{tpu_custom_call.1} parent=1 // pred_fallthru
      _
    %s48 = sadd.s32 0, 0
    %s49 = smul.u32 2, %s48
    %s50 = sadd.s32 0, 0
    %s51 = smul.u32 2, %s50
    %p52 = scmp.eq.s32.totalorder 0, 0
    // Predicated region
    $region18: #{tpu_custom_call.1} parent=1 // pred_check
      %p53 = pneg %p52
    $region19: #{tpu_custom_call.1} parent=1 // pred_check_branch
      %55 = sbr.rel (%p53) target = $region21
    $region20: #{tpu_custom_call.1} parent=1 // pred_region
      %56 = vst [vmem:[#allocation7] sm:$0xff] 0.0
      %57 = vst [vmem:[#allocation7 + $0x8] sm:$0xff] 0.0
    $region21: #{tpu_custom_call.1} parent=1 // pred_fallthru
      _
    %v58 = vld [vmem:[#allocation5] sm:$0xff]
    %v59 = vld [vmem:[#allocation5 + $0x8] sm:$0xff]
    %v60 = vld [vmem:[#allocation2] sm:$0xff]
    %v61 = vld [vmem:[#allocation2 + $0x8] sm:$0xff]
    %v62 = vlog2.pop %v60
    %v63 = vmul.f32 %v62, 0.6931472
    %v64 = vlog2.pop %v61
    %v65 = vmul.f32 %v64, 0.6931472
    %v66 = vmul.f32 %v58, %v63
    %v67 = vmul.f32 %v59, %v65
    %v68 = vld [vmem:[#allocation7] sm:$0xff]
    %v69 = vld [vmem:[#allocation7 + $0x8] sm:$0xff]
    %v70 = vadd.f32 %v68, %v66
    %v71 = vadd.f32 %v69, %v67
    %72 = vst [vmem:[#allocation7] sm:$0xff] %v70
    %73 = vst [vmem:[#allocation7 + $0x8] sm:$0xff] %v71
    // Predicated region
    $region22: #{tpu_custom_call.1} parent=1 // pred_check
      _
    $region23: #{tpu_custom_call.1} parent=1 // pred_check_branch
      %75 = sbr.rel (0) target = $region25
    $region24: #{tpu_custom_call.1} parent=1 // pred_region
      %s77 = ssub.s32 256, 256
      %78 = vsyncadd [#allocation4], %s77
      %s79 = sshll.u32 [#allocation7], 4
      %s80 = int_to_ptr.vmem [resolvable:$true] %s79
      %85 = dma.vmem_to_hbm [thread:$0]  %s80, 256, %s2, [#allocation4], 128, 128, 8
    $region25: #{tpu_custom_call.1} parent=1 // pred_fallthru
      _
    // Predicated region
    $region26: #{tpu_custom_call.1} parent=1 // pred_check
      _
    $region27: #{tpu_custom_call.1} parent=1 // pred_check_branch
      %87 = sbr.rel (0) target = $region29
    $region28: #{tpu_custom_call.1} parent=1 // pred_region
      %88 = dma.done [#allocation4], 256
    $region29: #{tpu_custom_call.1} parent=1 // pred_fallthru
      _
    %89 = vsyncpa [#allocation3], 1
    %90 = vsyncpa [#allocation6], 1
    %91 = vsyncpa [#allocation4], 1

</llo_original>
